<compile_context>
chip_gen: v5e
topology: v5e:2x2
jax: 0.10.0
libtpu: 0.0.40
codegen_flags: <defaults>
</compile_context>

<pallas_src>
import jax
import jax.numpy as jnp
from jax.experimental import pallas as pl
from jax.experimental.pallas import tpu as pltpu


def _round_up(x, m):
    return ((x + m - 1) // m) * m


# -----------------------------------------------------------------------------
# Kernels
# -----------------------------------------------------------------------------
def decoder_kernel_resident(x_ref, w1_ref, b1_ref, w2_ref, b2_ref, out_ref):
    """Grid: (batch tile i,).  All weights/biases are VMEM-resident.

    x_ref : (TB, L)      current batch tile (compute dtype)
    w1_ref: (L, H)       resident (compute dtype)
    b1_ref: (1, H)       resident, f32
    w2_ref: (H, D_pad)   resident (compute dtype)
    b2_ref: (1, D_pad)   resident, f32
    out   : (TB, D_pad)  out dtype (lane-dense, unmasked stores)
    """
    # First linear (MXU) + bias + ReLU, f32 accumulation / f32 elementwise;
    # cast once to the compute dtype before feeding the second matmul.
    h = jnp.dot(x_ref[...], w1_ref[...], preferred_element_type=jnp.float32)
    h = jnp.maximum(h + b1_ref[...], 0.0).astype(w2_ref.dtype)
    # Second linear (MXU), f32 accumulation, bias add in f32, single cast out.
    o = jnp.dot(h, w2_ref[...], preferred_element_type=jnp.float32)
    out_ref[...] = (o + b2_ref[...]).astype(out_ref.dtype)


def decoder_kernel_tiled(x_ref, w1_ref, b1_ref, w2_ref, b2_ref, out_ref, h_ref):
    """Fallback grid: (batch tile i, output-column tile j).

    The h scratch written at j == 0 is only valid because j is the innermost,
    sequential ("arbitrary") grid axis: every batch tile visits j == 0 first.
    Do NOT reorder the grid axes or mark j "parallel".

    h_ref : (TB, H) scratch in the compute dtype (bf16 by default).
    """
    j = pl.program_id(1)

    @pl.when(j == 0)
    def _():
        h = jnp.dot(x_ref[...], w1_ref[...], preferred_element_type=jnp.float32)
        # Store the hidden directly in the compute dtype: halves scratch bytes
        # and removes the per-j (TB, H) f32->bf16 cast.
        h_ref[...] = jnp.maximum(h + b1_ref[...], 0.0).astype(h_ref.dtype)

    o = jnp.dot(h_ref[...], w2_ref[...], preferred_element_type=jnp.float32)
    out_ref[...] = (o + b2_ref[...]).astype(out_ref.dtype)


# -----------------------------------------------------------------------------
# Wrapper
# -----------------------------------------------------------------------------
def decoder_forward(x, w1, b1, w2, b2, *,
                    batch_tile=512, n_tile=2048, use_bf16=True,
                    out_dtype=jnp.float32,
                    resident_vmem_budget_bytes=24 * 1024 * 1024):
    """x: (B, latent); w1: (latent, 128); b1: (128,); w2: (128, D_out);
    b2: (D_out,).  Returns (B, D_out) in `out_dtype`.

    batch_tile: rows per batch tile (multiple of 8; 512 default).
    n_tile:     output-column tile width for the tiled fallback (mult. of 128).
    use_bf16:   cast x/w1/w2 operands to bf16 (f32 MXU accumulation kept).
    out_dtype:  output dtype (bf16 halves the dominant writeback traffic).
    resident_vmem_budget_bytes: VMEM budget under which w2/b2 are kept fully
        resident (single 1-D grid).  Conservative 24 MiB default for v7x's
        64 MiB VMEM; v5e/v6e could go ~2x higher.
    """
    B, L = x.shape
    H = w1.shape[1]
    D_out = w2.shape[1]
    assert w1.shape == (L, H)
    assert w2.shape[0] == H
    assert batch_tile % 8 == 0 and n_tile % 128 == 0

    compute_dtype = jnp.bfloat16 if use_bf16 else jnp.float32
    out_dtype = jnp.dtype(out_dtype)

    # --- batch tiling --------------------------------------------------------
    TB = min(batch_tile, _round_up(B, 8))
    # v7x: the batch axis is "parallel" -> make sure both TensorCores get work
    # whenever there is enough batch to split (harmless on single-TC v5e/v6e).
    if B >= 16 and _round_up(B, TB) // TB < 2:
        TB = max(8, _round_up(-(-B // 2), 8))
    B_pad = _round_up(B, TB)

    # --- output padding (lane-dense, multiple of 128) -------------------------
    D_pad = _round_up(D_out, 128)

    # Conservative VMEM estimate for the resident path (assumes the resident
    # operands may still be double-buffered if pl.Buffered(1) is unsupported).
    csz = jnp.dtype(compute_dtype).itemsize
    osz = out_dtype.itemsize
    resident_bytes = (
        2 * (H * D_pad * csz + 4 * D_pad + L * H * csz + 4 * H)   # weights
        + 2 * TB * L * csz                                        # x, 2 bufs
        + 2 * TB * D_pad * osz                                    # out, 2 bufs
        + 4 * TB * H)                                             # f32 hidden
    use_resident = resident_bytes <= resident_vmem_budget_bytes

    # --- host-side casts / padding --------------------------------------------
    b1_p = jnp.asarray(b1, jnp.float32).reshape(1, H)
    b2_p = jnp.asarray(b2, jnp.float32).reshape(1, D_out)
    x_p = x.astype(compute_dtype)
    if B_pad != B:
        # Padded rows compute ReLU(b1) @ w2 + b2 (garbage) -- sliced off below.
        x_p = jnp.pad(x_p, ((0, B_pad - B), (0, 0)))
    w1_p = w1.astype(compute_dtype)
    w2_p = w2.astype(compute_dtype)
    # NOTE: L (latent) is deliberately NOT padded to 128 -- the first matmul
    # runs once per batch tile and is far from the bottleneck.

    # -------------------------------------------------------------------------
    def _resident_call(single_buffer_resident):
        w2_r, b2_r = w2_p, b2_p
        if D_pad != D_out:
            w2_r = jnp.pad(w2_p, ((0, 0), (0, D_pad - D_out)))
            b2_r = jnp.pad(b2_p, ((0, 0), (0, D_pad - D_out)))

        rkw = ({"pipeline_mode": pl.Buffered(1)}
               if single_buffer_resident else {})

        def rspec(shape):
            # Constant index_map -> resident operand; a 2nd buffer is dead VMEM.
            return pl.BlockSpec(shape, lambda i: (0, 0), **rkw)

        compiler_kwargs = {}
        if resident_bytes > 12 * 1024 * 1024:
            compiler_kwargs["vmem_limit_bytes"] = int(
                min(64 * 1024 * 1024, resident_bytes + (8 << 20)))

        return pl.pallas_call(
            decoder_kernel_resident,
            out_shape=jax.ShapeDtypeStruct((B_pad, D_pad), out_dtype),
            grid_spec=pltpu.PrefetchScalarGridSpec(
                num_scalar_prefetch=0,
                grid=(B_pad // TB,),
                in_specs=[
                    pl.BlockSpec((TB, L), lambda i: (i, 0)),  # x batch tile
                    rspec((L, H)),                            # w1 (resident)
                    rspec((1, H)),                            # b1 (resident)
                    rspec((H, D_pad)),                        # w2 (resident)
                    rspec((1, D_pad)),                        # b2 (resident)
                ],
                out_specs=pl.BlockSpec((TB, D_pad), lambda i: (i, 0)),
            ),
            compiler_params=pltpu.CompilerParams(
                dimension_semantics=("parallel",), **compiler_kwargs),
        )(x_p, w1_p, b1_p, w2_r, b2_r)

    def _tiled_call(single_buffer_resident):
        TN = min(n_tile, D_pad)
        D_pad_t = _round_up(D_pad, TN)
        w2_t, b2_t = w2_p, b2_p
        if D_pad_t != D_out:
            w2_t = jnp.pad(w2_p, ((0, 0), (0, D_pad_t - D_out)))
            b2_t = jnp.pad(b2_p, ((0, 0), (0, D_pad_t - D_out)))

        rkw = ({"pipeline_mode": pl.Buffered(1)}
               if single_buffer_resident else {})

        return pl.pallas_call(
            decoder_kernel_tiled,
            out_shape=jax.ShapeDtypeStruct((B_pad, D_pad_t), out_dtype),
            grid_spec=pltpu.PrefetchScalarGridSpec(
                num_scalar_prefetch=0,
                grid=(B_pad // TB, D_pad_t // TN),
                in_specs=[
                    pl.BlockSpec((TB, L), lambda i, j: (i, 0)),        # x
                    pl.BlockSpec((L, H), lambda i, j: (0, 0), **rkw),  # w1
                    pl.BlockSpec((1, H), lambda i, j: (0, 0), **rkw),  # b1
                    pl.BlockSpec((H, TN), lambda i, j: (0, j)),        # w2 tile
                    pl.BlockSpec((1, TN), lambda i, j: (0, j)),        # b2 tile
                ],
                out_specs=pl.BlockSpec((TB, TN), lambda i, j: (i, j)),
                # Hidden scratch in the compute dtype (bf16 by default).
                scratch_shapes=[pltpu.VMEM((TB, H), compute_dtype)],
            ),
            compiler_params=pltpu.CompilerParams(
                # Batch tiles are independent -> "parallel"; the j axis
                # carries the h scratch -> must stay innermost + "arbitrary".
                dimension_semantics=("parallel", "arbitrary")),
        )(x_p, w1_p, b1_p, w2_t, b2_t)

    def _run(single_buffer_resident):
        if use_resident:
            return _resident_call(single_buffer_resident)
        return _tiled_call(single_buffer_resident)

    try:
        out = _run(True)
    except Exception:
        # pl.Buffered(1) pipeline_mode not supported by this jax build:
        # fall back to default (double-buffered) resident operands.
        out = _run(False)

    return out[:B, :D_out]


def init_linear_params(key, fan_in, fan_out):
    """Match PyTorch nn.Linear default init: U(-1/sqrt(fan_in), 1/sqrt(fan_in))."""
    kw, kb = jax.random.split(key)
    bound = 1.0 / jnp.sqrt(jnp.float32(fan_in))
    w = jax.random.uniform(kw, (fan_in, fan_out), jnp.float32, -bound, bound)
    b = jax.random.uniform(kb, (fan_out,), jnp.float32, -bound, bound)
    return w, b


if __name__ == "__main__":
    # Small shapes consistent with the module's forward.
    batch = 8
    input_size = 16
    latent_size = 32
    sequence_length = 8
    hidden = 128
    out_dim = input_size * sequence_length  # 128

    key = jax.random.PRNGKey(0)
    kx, k1, k2 = jax.random.split(key, 3)

    x = jax.random.normal(kx, (batch, latent_size), dtype=jnp.float32)
    w1, b1 = init_linear_params(k1, latent_size, hidden)
    w2, b2 = init_linear_params(k2, hidden, out_dim)

    # Reference in plain JAX (same semantics as the PyTorch module, f32).
    ref = jnp.maximum(x @ w1 + b1, 0.0) @ w2 + b2

    # 1) Resident-weight fast path, pure f32: tight agreement.
    out_f32 = jax.block_until_ready(
        decoder_forward(x, w1, b1, w2, b2, use_bf16=False))
    assert out_f32.shape == (batch, out_dim)
    assert jnp.allclose(out_f32, ref, atol=1e-5, rtol=1e-5)

    # 2) Default bf16-operand / f32-accumulate fast path.
    out_bf16 = jax.block_until_ready(
        decoder_forward(x, w1, b1, w2, b2, use_bf16=True))
    assert out_bf16.shape == (batch, out_dim)
    assert jnp.allclose(out_bf16, ref, atol=3e-2, rtol=3e-2)

    # 3) bf16 output writeback (halves the dominant HBM traffic at scale).
    out_bf16_o = jax.block_until_ready(
        decoder_forward(x, w1, b1, w2, b2, use_bf16=True,
                        out_dtype=jnp.bfloat16))
    assert out_bf16_o.dtype == jnp.bfloat16
    assert jnp.allclose(out_bf16_o.astype(jnp.float32), ref,
                        atol=5e-2, rtol=5e-2)

    # 4) Force the tiled fallback path (only used for very large D_out).
    out_tiled = jax.block_until_ready(
        decoder_forward(x, w1, b1, w2, b2, use_bf16=False,
                        resident_vmem_budget_bytes=0))
    assert out_tiled.shape == (batch, out_dim)
    assert jnp.allclose(out_tiled, ref, atol=1e-5, rtol=1e-5)

    print("KERNEL_OK")
</pallas_src>

<mosaic_0001>
module attributes {stable_mosaic.version = 11 : i64} {
  func.func @decoder_kernel_resident(%arg0: i32, %arg1: memref<8x32xf32, #tpu.memory_space<vmem>>, %arg2: memref<32x128xf32, #tpu.memory_space<vmem>>, %arg3: memref<1x128xf32, #tpu.memory_space<vmem>>, %arg4: memref<128x128xf32, #tpu.memory_space<vmem>>, %arg5: memref<1x128xf32, #tpu.memory_space<vmem>>, %arg6: memref<8x128xf32, #tpu.memory_space<vmem>>) attributes {dimension_semantics = [#tpu.dimension_semantics<parallel>], iteration_bounds = array<i64: 1>, scalar_prefetch = 0 : i64, scratch_operands = 0 : i64, tpu.core_type = #tpu.core_type<tc>, window_params = [{transform_indices = @transform_0, window_bounds = array<i64: 8, 32>}, {pipeline_mode = #tpu.pipeline_mode<synchronous>, transform_indices = @transform_1, window_bounds = array<i64: 32, 128>}, {pipeline_mode = #tpu.pipeline_mode<synchronous>, transform_indices = @transform_2, window_bounds = array<i64: 1, 128>}, {pipeline_mode = #tpu.pipeline_mode<synchronous>, transform_indices = @transform_3, window_bounds = array<i64: 128, 128>}, {pipeline_mode = #tpu.pipeline_mode<synchronous>, transform_indices = @transform_4, window_bounds = array<i64: 1, 128>}, {transform_indices = @transform_5, window_bounds = array<i64: 8, 128>}]} {
    %c0 = arith.constant 0 : index
    %c0_0 = arith.constant 0 : index
    %0 = vector.load %arg1[%c0, %c0_0] : memref<8x32xf32, #tpu.memory_space<vmem>>, vector<8x32xf32>
    %c0_1 = arith.constant 0 : index
    %c0_2 = arith.constant 0 : index
    %1 = vector.load %arg2[%c0_1, %c0_2] : memref<32x128xf32, #tpu.memory_space<vmem>>, vector<32x128xf32>
    %cst = arith.constant dense<0.000000e+00> : vector<8x128xf32>
    %2 = tpu.matmul %0, %1, %cst {dimension_numbers = #tpu.dot_dimension_numbers<[1], [0], [0], [1], [0, 0, 1, 1], [], []>} : vector<8x32xf32>, vector<32x128xf32>, vector<8x128xf32> -> vector<8x128xf32>
    %c0_3 = arith.constant 0 : index
    %c0_4 = arith.constant 0 : index
    %3 = vector.load %arg3[%c0_3, %c0_4] : memref<1x128xf32, #tpu.memory_space<vmem>>, vector<1x128xf32>
    %4 = vector.broadcast %3 : vector<1x128xf32> to vector<8x128xf32>
    %5 = arith.addf %2, %4 : vector<8x128xf32>
    %cst_5 = arith.constant 0.000000e+00 : f32
    %6 = vector.broadcast %cst_5 : f32 to vector<8x128xf32>
    %7 = arith.maximumf %5, %6 : vector<8x128xf32>
    %c0_6 = arith.constant 0 : index
    %c0_7 = arith.constant 0 : index
    %8 = vector.load %arg4[%c0_6, %c0_7] : memref<128x128xf32, #tpu.memory_space<vmem>>, vector<128x128xf32>
    %cst_8 = arith.constant dense<0.000000e+00> : vector<8x128xf32>
    %9 = tpu.matmul %7, %8, %cst_8 {dimension_numbers = #tpu.dot_dimension_numbers<[1], [0], [0], [1], [0, 0, 1, 1], [], []>} : vector<8x128xf32>, vector<128x128xf32>, vector<8x128xf32> -> vector<8x128xf32>
    %c0_9 = arith.constant 0 : index
    %c0_10 = arith.constant 0 : index
    %10 = vector.load %arg5[%c0_9, %c0_10] : memref<1x128xf32, #tpu.memory_space<vmem>>, vector<1x128xf32>
    %11 = vector.broadcast %10 : vector<1x128xf32> to vector<8x128xf32>
    %12 = arith.addf %9, %11 : vector<8x128xf32>
    %c0_11 = arith.constant 0 : index
    %c0_12 = arith.constant 0 : index
    %13 = vector.load %arg6[%c0_11, %c0_12] : memref<8x128xf32, #tpu.memory_space<vmem>>, vector<8x128xf32>
    tpu.vector_store %arg6[%c0_11, %c0_12], %12 {strides = array<i32>} : memref<8x128xf32, #tpu.memory_space<vmem>>, vector<8x128xf32>,
    return
  }
  func.func @transform_0(%arg0: i32) -> (i32, i32) {
    %c0_i32 = arith.constant 0 : i32
    %c0_i32_0 = arith.constant 0 : i32
    return %arg0, %c0_i32 : i32, i32
  }
  func.func @transform_1(%arg0: i32) -> (i32, i32) {
    %c0_i32 = arith.constant 0 : i32
    %c0_i32_0 = arith.constant 0 : i32
    %c0_i32_1 = arith.constant 0 : i32
    return %c0_i32, %c0_i32_0 : i32, i32
  }
  func.func @transform_2(%arg0: i32) -> (i32, i32) {
    %c0_i32 = arith.constant 0 : i32
    %c0_i32_0 = arith.constant 0 : i32
    %c0_i32_1 = arith.constant 0 : i32
    return %c0_i32, %c0_i32_0 : i32, i32
  }
  func.func @transform_3(%arg0: i32) -> (i32, i32) {
    %c0_i32 = arith.constant 0 : i32
    %c0_i32_0 = arith.constant 0 : i32
    %c0_i32_1 = arith.constant 0 : i32
    return %c0_i32, %c0_i32_0 : i32, i32
  }
  func.func @transform_4(%arg0: i32) -> (i32, i32) {
    %c0_i32 = arith.constant 0 : i32
    %c0_i32_0 = arith.constant 0 : i32
    %c0_i32_1 = arith.constant 0 : i32
    return %c0_i32, %c0_i32_0 : i32, i32
  }
  func.func @transform_5(%arg0: i32) -> (i32, i32) {
    %c0_i32 = arith.constant 0 : i32
    %c0_i32_0 = arith.constant 0 : i32
    return %arg0, %c0_i32 : i32, i32
  }
}

module attributes {stable_mosaic.version = 11 : i64} {
  func.func @decoder_kernel_resident(%arg0: i32, %arg1: memref<8x32xf32, #tpu.memory_space<vmem>>, %arg2: memref<32x128xf32, #tpu.memory_space<vmem>>, %arg3: memref<1x128xf32, #tpu.memory_space<vmem>>, %arg4: memref<128x128xf32, #tpu.memory_space<vmem>>, %arg5: memref<1x128xf32, #tpu.memory_space<vmem>>, %arg6: memref<8x128xf32, #tpu.memory_space<vmem>>) attributes {dimension_semantics = [#tpu.dimension_semantics<parallel>], iteration_bounds = array<i64: 1>, scalar_prefetch = 0 : i64, scratch_operands = 0 : i64, tpu.core_type = #tpu.core_type<tc>, window_params = [{transform_indices = @transform_0, window_bounds = array<i64: 8, 32>}, {pipeline_mode = #tpu.pipeline_mode<synchronous>, transform_indices = @transform_1, window_bounds = array<i64: 32, 128>}, {pipeline_mode = #tpu.pipeline_mode<synchronous>, transform_indices = @transform_2, window_bounds = array<i64: 1, 128>}, {pipeline_mode = #tpu.pipeline_mode<synchronous>, transform_indices = @transform_3, window_bounds = array<i64: 128, 128>}, {pipeline_mode = #tpu.pipeline_mode<synchronous>, transform_indices = @transform_4, window_bounds = array<i64: 1, 128>}, {transform_indices = @transform_5, window_bounds = array<i64: 8, 128>}]} {
    %c0 = arith.constant 0 : index
    %c0_0 = arith.constant 0 : index
    %0 = vector.load %arg1[%c0, %c0_0] : memref<8x32xf32, #tpu.memory_space<vmem>>, vector<8x32xf32>
    %c0_1 = arith.constant 0 : index
    %c0_2 = arith.constant 0 : index
    %1 = vector.load %arg2[%c0_1, %c0_2] : memref<32x128xf32, #tpu.memory_space<vmem>>, vector<32x128xf32>
    %cst = arith.constant dense<0.000000e+00> : vector<8x128xf32>
    %2 = tpu.matmul %0, %1, %cst {dimension_numbers = #tpu.dot_dimension_numbers<[1], [0], [0], [1], [0, 0, 1, 1], [], []>} : vector<8x32xf32>, vector<32x128xf32>, vector<8x128xf32> -> vector<8x128xf32>
    %c0_3 = arith.constant 0 : index
    %c0_4 = arith.constant 0 : index
    %3 = vector.load %arg3[%c0_3, %c0_4] : memref<1x128xf32, #tpu.memory_space<vmem>>, vector<1x128xf32>
    %4 = vector.broadcast %3 : vector<1x128xf32> to vector<8x128xf32>
    %5 = arith.addf %2, %4 : vector<8x128xf32>
    %cst_5 = arith.constant 0.000000e+00 : f32
    %6 = vector.broadcast %cst_5 : f32 to vector<8x128xf32>
    %7 = arith.maximumf %5, %6 : vector<8x128xf32>
    %c0_6 = arith.constant 0 : index
    %c0_7 = arith.constant 0 : index
    %8 = vector.load %arg4[%c0_6, %c0_7] : memref<128x128xf32, #tpu.memory_space<vmem>>, vector<128x128xf32>
    %cst_8 = arith.constant dense<0.000000e+00> : vector<8x128xf32>
    %9 = tpu.matmul %7, %8, %cst_8 {dimension_numbers = #tpu.dot_dimension_numbers<[1], [0], [0], [1], [0, 0, 1, 1], [], []>} : vector<8x128xf32>, vector<128x128xf32>, vector<8x128xf32> -> vector<8x128xf32>
    %c0_9 = arith.constant 0 : index
    %c0_10 = arith.constant 0 : index
    %10 = vector.load %arg5[%c0_9, %c0_10] : memref<1x128xf32, #tpu.memory_space<vmem>>, vector<1x128xf32>
    %11 = vector.broadcast %10 : vector<1x128xf32> to vector<8x128xf32>
    %12 = arith.addf %9, %11 : vector<8x128xf32>
    %c0_11 = arith.constant 0 : index
    %c0_12 = arith.constant 0 : index
    %13 = vector.load %arg6[%c0_11, %c0_12] : memref<8x128xf32, #tpu.memory_space<vmem>>, vector<8x128xf32>
    tpu.vector_store %arg6[%c0_11, %c0_12], %12 {strides = array<i32>} : memref<8x128xf32, #tpu.memory_space<vmem>>, vector<8x128xf32>,
    return
  }
  func.func @transform_0(%arg0: i32) -> (i32, i32) {
    %c0_i32 = arith.constant 0 : i32
    %c0_i32_0 = arith.constant 0 : i32
    return %arg0, %c0_i32 : i32, i32
  }
  func.func @transform_1(%arg0: i32) -> (i32, i32) {
    %c0_i32 = arith.constant 0 : i32
    %c0_i32_0 = arith.constant 0 : i32
    %c0_i32_1 = arith.constant 0 : i32
    return %c0_i32, %c0_i32_0 : i32, i32
  }
  func.func @transform_2(%arg0: i32) -> (i32, i32) {
    %c0_i32 = arith.constant 0 : i32
    %c0_i32_0 = arith.constant 0 : i32
    %c0_i32_1 = arith.constant 0 : i32
    return %c0_i32, %c0_i32_0 : i32, i32
  }
  func.func @transform_3(%arg0: i32) -> (i32, i32) {
    %c0_i32 = arith.constant 0 : i32
    %c0_i32_0 = arith.constant 0 : i32
    %c0_i32_1 = arith.constant 0 : i32
    return %c0_i32, %c0_i32_0 : i32, i32
  }
  func.func @transform_4(%arg0: i32) -> (i32, i32) {
    %c0_i32 = arith.constant 0 : i32
    %c0_i32_0 = arith.constant 0 : i32
    %c0_i32_1 = arith.constant 0 : i32
    return %c0_i32, %c0_i32_0 : i32, i32
  }
  func.func @transform_5(%arg0: i32) -> (i32, i32) {
    %c0_i32 = arith.constant 0 : i32
    %c0_i32_0 = arith.constant 0 : i32
    return %arg0, %c0_i32 : i32, i32
  }
}

</mosaic_0001>

<llo_original>
// kernel: tpu_custom_call.1
$region0: #{tpu_custom_call.1}
  #allocation0 [shape = 'u32[]', space=smem, size = 0x4, offset = 0x4, fixed_abs, tag = 'smem constant byte address 0x4 - core index']
  #allocation1 [shape = 'u32[72,128]{1,0:T(1,128)}', space=vmem, size = 0x9000, scoped, tag = 'internal scratch']
  %s0 = inlined_call_operand.hbm [shape: f32[8,32], index: 0, kind: input, shape index: {}]
  %s1 = inlined_call_operand.hbm [shape: f32[32,128], index: 1, kind: input, shape index: {}]
  %s2 = inlined_call_operand.vmem [shape: f32[1,128], index: 2, kind: input, shape index: {}]
  %s3 = inlined_call_operand.hbm [shape: f32[128,128], index: 3, kind: input, shape index: {}]
  %s4 = inlined_call_operand.vmem [shape: f32[1,128], index: 4, kind: input, shape index: {}]
  %s5 = inlined_call_operand.hbm [shape: f32[8,128], index: 5, kind: output, shape index: {}]
  %s6 = sld [smem:[#allocation0]]
  $region42: #{tpu_custom_call.1} parent=0
    _
  %s8 = ssub.s32 1, %s6
  %s9 = scalar_select 0, %s8, %s6
  $region1: #{tpu_custom_call.1} parent=0
    #allocation2 [shape = 'u8[4096]{0}', space=vmem, size = 0x1000, scoped, tag = 'input window, operand 0, single buffered']
    #allocation3 [shape = 's32[1]{0}', space=sflag, size = 0x4, scoped, tag = 'scoped memory for tpu_custom_call.1']
    #allocation4 [shape = 's32[1]{0}', space=sflag, size = 0x4, scoped, tag = 'scoped memory for tpu_custom_call.1']
    #allocation5 [shape = 'u8[16384]{0}', space=vmem, size = 0x4000, scoped, tag = 'input window, operand 1, single buffered']
    #allocation6 [shape = 's32[1]{0}', space=sflag, size = 0x4, scoped, tag = 'scoped memory for tpu_custom_call.1']
    #allocation7 [shape = 'u8[65536]{0}', space=vmem, size = 0x10000, scoped, tag = 'input window, operand 3, single buffered']
    #allocation8 [shape = 'u8[4096]{0}', space=vmem, size = 0x1000, scoped, tag = 'output window, operand 0, single buffered']
    %10 = vsyncpa [#allocation3], 0
    %11 = vsyncpa [#allocation6], 0
    %12 = vsyncpa [#allocation4], 0
    // Predicated region
    $region2: #{tpu_custom_call.1} parent=1 // pred_check
      _
    $region3: #{tpu_custom_call.1} parent=1 // pred_check_branch
      %14 = sbr.rel (0) target = $region5
    $region4: #{tpu_custom_call.1} parent=1 // pred_region
      %16 = vsyncadd [#allocation3], 0
      %s18 = sshll.u32 %s0, 4
      %s19 = int_to_ptr.hbm [resolvable:$true] %s18
      %s20 = sshll.u32 [#allocation2], 4
      %s21 = int_to_ptr.vmem [resolvable:$true] %s20
      %23 = dma.hbm_to_vmem [thread:$0]  %s19, 128, %s21, [#allocation3]
    $region5: #{tpu_custom_call.1} parent=1 // pred_fallthru
      _
    // Predicated region
    $region6: #{tpu_custom_call.1} parent=1 // pred_check
      _
    $region7: #{tpu_custom_call.1} parent=1 // pred_check_branch
      %25 = sbr.rel (0) target = $region9
    $region8: #{tpu_custom_call.1} parent=1 // pred_region
      %27 = vsyncadd [#allocation6], 0
      %s28 = sshll.u32 %s1, 4
      %s29 = int_to_ptr.hbm [resolvable:$true] %s28
      %s30 = sshll.u32 [#allocation5], 4
      %s31 = int_to_ptr.vmem [resolvable:$true] %s30
      %36 = dma.hbm_to_vmem [thread:$0]  %s29, 512, %s31, [#allocation6], 128, 128, 8
    $region9: #{tpu_custom_call.1} parent=1 // pred_fallthru
      _
    // Predicated region
    $region10: #{tpu_custom_call.1} parent=1 // pred_check
      _
    $region11: #{tpu_custom_call.1} parent=1 // pred_check_branch
      %38 = sbr.rel (0) target = $region13
    $region12: #{tpu_custom_call.1} parent=1 // pred_region
      _
    $region13: #{tpu_custom_call.1} parent=1 // pred_fallthru
      _
    // Predicated region
    $region14: #{tpu_custom_call.1} parent=1 // pred_check
      _
    $region15: #{tpu_custom_call.1} parent=1 // pred_check_branch
      %40 = sbr.rel (0) target = $region17
    $region16: #{tpu_custom_call.1} parent=1 // pred_region
      %42 = vsyncadd [#allocation6], 0
      %s43 = sshll.u32 %s3, 4
      %s44 = int_to_ptr.hbm [resolvable:$true] %s43
      %s45 = sshll.u32 [#allocation7], 4
      %s46 = int_to_ptr.vmem [resolvable:$true] %s45
      %51 = dma.hbm_to_vmem [thread:$0]  %s44, 2048, %s46, [#allocation6], 128, 128, 8
    $region17: #{tpu_custom_call.1} parent=1 // pred_fallthru
      _
    // Predicated region
    $region18: #{tpu_custom_call.1} parent=1 // pred_check
      _
    $region19: #{tpu_custom_call.1} parent=1 // pred_check_branch
      %53 = sbr.rel (0) target = $region21
    $region20: #{tpu_custom_call.1} parent=1 // pred_region
      _
    $region21: #{tpu_custom_call.1} parent=1 // pred_fallthru
      _
    // Predicated region
    $region22: #{tpu_custom_call.1} parent=1 // pred_check
      _
    $region23: #{tpu_custom_call.1} parent=1 // pred_check_branch
      %55 = sbr.rel (0) target = $region25
    $region24: #{tpu_custom_call.1} parent=1 // pred_region
      %57 = dma.done [#allocation3], 128
    $region25: #{tpu_custom_call.1} parent=1 // pred_fallthru
      _
    // Predicated region
    $region26: #{tpu_custom_call.1} parent=1 // pred_check
      _
    $region27: #{tpu_custom_call.1} parent=1 // pred_check_branch
      %59 = sbr.rel (0) target = $region29
    $region28: #{tpu_custom_call.1} parent=1 // pred_region
      %61 = dma.done [#allocation6], 512
    $region29: #{tpu_custom_call.1} parent=1 // pred_fallthru
      _
    // Predicated region
    $region30: #{tpu_custom_call.1} parent=1 // pred_check
      _
    $region31: #{tpu_custom_call.1} parent=1 // pred_check_branch
      %63 = sbr.rel (0) target = $region33
    $region32: #{tpu_custom_call.1} parent=1 // pred_region
      %65 = dma.done [#allocation6], 2048
    $region33: #{tpu_custom_call.1} parent=1 // pred_fallthru
      _
    %v66 = vld [vmem:[#allocation2] sm:$0xff]
    %v67 = vld [vmem:[#allocation5] sm:$0xff]
    %v68 = vld [vmem:[#allocation5 + $0x8] sm:$0xff]
    %v69 = vld [vmem:[#allocation5 + $0x10] sm:$0xff]
    %v70 = vld [vmem:[#allocation5 + $0x18] sm:$0xff]
    %v71 = vld [vmem:[%s2] sm:$0x1]
    %v73 = vperm.slane %v71, 0
    %vm75 = vcmask 261120
    %v77 = vsel %vm75, %v66, 0
    %79 = vmatpush.msra.mxu0 0.0
    %80 = vmatpush.msra.mxu0 0.0
    %81 = vmatpush.msra.mxu0 0.0
    %82 = vmatpush.msra.mxu0 0.0
    %83 = vmatpush.msra.mxu0 0.0
    %84 = vmatpush.msra.mxu0 0.0
    %85 = vmatpush.msra.mxu0 0.0
    %86 = vmatpush.msra.mxu0 0.0
    %87 = vmatpush.msra.mxu0 0.0
    %88 = vmatpush.msra.mxu0 0.0
    %89 = vmatpush.msra.mxu0 0.0
    %90 = vmatpush.msra.mxu0 0.0
    %91 = vmatpush.msra.mxu0 %v70
    %92 = vmatpush.msra.mxu0 %v69
    %93 = vmatpush.msra.mxu0 %v68
    %94 = vmatpush.msra.mxu0 %v67
    %95 = vmatmul.f32.gmra.mxu0 %v77
    %v96 = vpop.f32.mrf.mxu0
    %v97 = vadd.f32 %v73, %v96
    %98 = vdwg.mxu0
    %v99 = vmax.f32 %v97, 0.0
    %v100 = vld [vmem:[#allocation7] sm:$0xff]
    %v101 = vld [vmem:[#allocation7 + $0x8] sm:$0xff]
    %v102 = vld [vmem:[#allocation7 + $0x10] sm:$0xff]
    %v103 = vld [vmem:[#allocation7 + $0x18] sm:$0xff]
    %v104 = vld [vmem:[#allocation7 + $0x20] sm:$0xff]
    %v105 = vld [vmem:[#allocation7 + $0x28] sm:$0xff]
    %v106 = vld [vmem:[#allocation7 + $0x30] sm:$0xff]
    %v107 = vld [vmem:[#allocation7 + $0x38] sm:$0xff]
    %v108 = vld [vmem:[#allocation7 + $0x40] sm:$0xff]
    %v109 = vld [vmem:[#allocation7 + $0x48] sm:$0xff]
    %v110 = vld [vmem:[#allocation7 + $0x50] sm:$0xff]
    %v111 = vld [vmem:[#allocation7 + $0x58] sm:$0xff]
    %v112 = vld [vmem:[#allocation7 + $0x60] sm:$0xff]
    %v113 = vld [vmem:[#allocation7 + $0x68] sm:$0xff]
    %v114 = vld [vmem:[#allocation7 + $0x70] sm:$0xff]
    %v115 = vld [vmem:[#allocation7 + $0x78] sm:$0xff]
    %v116 = vld [vmem:[%s4] sm:$0x1]
    %v118 = vperm.slane %v116, 0
    %120 = vmatpush.msra.mxu0 %v115
    %121 = vmatpush.msra.mxu0 %v114
    %122 = vmatpush.msra.mxu0 %v113
    %123 = vmatpush.msra.mxu0 %v112
    %124 = vmatpush.msra.mxu0 %v111
    %125 = vmatpush.msra.mxu0 %v110
    %126 = vmatpush.msra.mxu0 %v109
    %127 = vmatpush.msra.mxu0 %v108
    %128 = vmatpush.msra.mxu0 %v107
    %129 = vmatpush.msra.mxu0 %v106
    %130 = vmatpush.msra.mxu0 %v105
    %131 = vmatpush.msra.mxu0 %v104
    %132 = vmatpush.msra.mxu0 %v103
    %133 = vmatpush.msra.mxu0 %v102
    %134 = vmatpush.msra.mxu0 %v101
    %135 = vmatpush.msra.mxu0 %v100
    %136 = vmatmul.f32.gmra.mxu0 %v99
    %v137 = vpop.f32.mrf.mxu0
    %v138 = vadd.f32 %v118, %v137
    %139 = vdwg.mxu0
    %140 = vst [vmem:[#allocation8] sm:$0xff] %v138
    // Predicated region
    $region34: #{tpu_custom_call.1} parent=1 // pred_check
      _
    $region35: #{tpu_custom_call.1} parent=1 // pred_check_branch
      %142 = sbr.rel (0) target = $region37
    $region36: #{tpu_custom_call.1} parent=1 // pred_region
      %144 = vsyncadd [#allocation4], 0
      %s146 = sshll.u32 [#allocation8], 4
      %s147 = int_to_ptr.vmem [resolvable:$true] %s146
      %s148 = sshll.u32 %s5, 4
      %s149 = int_to_ptr.hbm [resolvable:$true] %s148
      %151 = dma.vmem_to_hbm [thread:$0]  %s147, 128, %s149, [#allocation4]
    $region37: #{tpu_custom_call.1} parent=1 // pred_fallthru
      _
    // Predicated region
    $region38: #{tpu_custom_call.1} parent=1 // pred_check
      _
    $region39: #{tpu_custom_call.1} parent=1 // pred_check_branch
      %153 = sbr.rel (0) target = $region41
    $region40: #{tpu_custom_call.1} parent=1 // pred_region
      %155 = dma.done [#allocation4], 128
    $region41: #{tpu_custom_call.1} parent=1 // pred_fallthru
      _
    %156 = vsyncpa [#allocation3], 1
    %157 = vsyncpa [#allocation6], 1
    %158 = vsyncpa [#allocation4], 1

// kernel: tpu_custom_call.1
$region0: #{tpu_custom_call.1}
  #allocation0 [shape = 'u32[]', space=smem, size = 0x4, offset = 0x4, fixed_abs, tag = 'smem constant byte address 0x4 - core index']
  #allocation1 [shape = 'u32[72,128]{1,0:T(1,128)}', space=vmem, size = 0x9000, scoped, tag = 'internal scratch']
  %s0 = inlined_call_operand.hbm [shape: f32[8,32], index: 0, kind: input, shape index: {}]
  %s1 = inlined_call_operand.hbm [shape: f32[32,128], index: 1, kind: input, shape index: {}]
  %s2 = inlined_call_operand.vmem [shape: f32[1,128], index: 2, kind: input, shape index: {}]
  %s3 = inlined_call_operand.hbm [shape: f32[128,128], index: 3, kind: input, shape index: {}]
  %s4 = inlined_call_operand.vmem [shape: f32[1,128], index: 4, kind: input, shape index: {}]
  %s5 = inlined_call_operand.hbm [shape: f32[8,128], index: 5, kind: output, shape index: {}]
  %s6 = sld [smem:[#allocation0]]
  $region42: #{tpu_custom_call.1} parent=0
    _
  %s8 = ssub.s32 1, %s6
  %s9 = scalar_select 0, %s8, %s6
  $region1: #{tpu_custom_call.1} parent=0
    #allocation2 [shape = 'u8[4096]{0}', space=vmem, size = 0x1000, scoped, tag = 'input window, operand 0, single buffered']
    #allocation3 [shape = 's32[1]{0}', space=sflag, size = 0x4, scoped, tag = 'scoped memory for tpu_custom_call.1']
    #allocation4 [shape = 's32[1]{0}', space=sflag, size = 0x4, scoped, tag = 'scoped memory for tpu_custom_call.1']
    #allocation5 [shape = 'u8[16384]{0}', space=vmem, size = 0x4000, scoped, tag = 'input window, operand 1, single buffered']
    #allocation6 [shape = 's32[1]{0}', space=sflag, size = 0x4, scoped, tag = 'scoped memory for tpu_custom_call.1']
    #allocation7 [shape = 'u8[65536]{0}', space=vmem, size = 0x10000, scoped, tag = 'input window, operand 3, single buffered']
    #allocation8 [shape = 'u8[4096]{0}', space=vmem, size = 0x1000, scoped, tag = 'output window, operand 0, single buffered']
    %10 = vsyncpa [#allocation3], 0
    %11 = vsyncpa [#allocation6], 0
    %12 = vsyncpa [#allocation4], 0
    // Predicated region
    $region2: #{tpu_custom_call.1} parent=1 // pred_check
      _
    $region3: #{tpu_custom_call.1} parent=1 // pred_check_branch
      %14 = sbr.rel (0) target = $region5
    $region4: #{tpu_custom_call.1} parent=1 // pred_region
      %16 = vsyncadd [#allocation3], 0
      %s18 = sshll.u32 %s0, 4
      %s19 = int_to_ptr.hbm [resolvable:$true] %s18
      %s20 = sshll.u32 [#allocation2], 4
      %s21 = int_to_ptr.vmem [resolvable:$true] %s20
      %23 = dma.hbm_to_vmem [thread:$0]  %s19, 128, %s21, [#allocation3]
    $region5: #{tpu_custom_call.1} parent=1 // pred_fallthru
      _
    // Predicated region
    $region6: #{tpu_custom_call.1} parent=1 // pred_check
      _
    $region7: #{tpu_custom_call.1} parent=1 // pred_check_branch
      %25 = sbr.rel (0) target = $region9
    $region8: #{tpu_custom_call.1} parent=1 // pred_region
      %27 = vsyncadd [#allocation6], 0
      %s28 = sshll.u32 %s1, 4
      %s29 = int_to_ptr.hbm [resolvable:$true] %s28
      %s30 = sshll.u32 [#allocation5], 4
      %s31 = int_to_ptr.vmem [resolvable:$true] %s30
      %36 = dma.hbm_to_vmem [thread:$0]  %s29, 512, %s31, [#allocation6], 128, 128, 8
    $region9: #{tpu_custom_call.1} parent=1 // pred_fallthru
      _
    // Predicated region
    $region10: #{tpu_custom_call.1} parent=1 // pred_check
      _
    $region11: #{tpu_custom_call.1} parent=1 // pred_check_branch
      %38 = sbr.rel (0) target = $region13
    $region12: #{tpu_custom_call.1} parent=1 // pred_region
      _
    $region13: #{tpu_custom_call.1} parent=1 // pred_fallthru
      _
    // Predicated region
    $region14: #{tpu_custom_call.1} parent=1 // pred_check
      _
    $region15: #{tpu_custom_call.1} parent=1 // pred_check_branch
      %40 = sbr.rel (0) target = $region17
    $region16: #{tpu_custom_call.1} parent=1 // pred_region
      %42 = vsyncadd [#allocation6], 0
      %s43 = sshll.u32 %s3, 4
      %s44 = int_to_ptr.hbm [resolvable:$true] %s43
      %s45 = sshll.u32 [#allocation7], 4
      %s46 = int_to_ptr.vmem [resolvable:$true] %s45
      %51 = dma.hbm_to_vmem [thread:$0]  %s44, 2048, %s46, [#allocation6], 128, 128, 8
    $region17: #{tpu_custom_call.1} parent=1 // pred_fallthru
      _
    // Predicated region
    $region18: #{tpu_custom_call.1} parent=1 // pred_check
      _
    $region19: #{tpu_custom_call.1} parent=1 // pred_check_branch
      %53 = sbr.rel (0) target = $region21
    $region20: #{tpu_custom_call.1} parent=1 // pred_region
      _
    $region21: #{tpu_custom_call.1} parent=1 // pred_fallthru
      _
    // Predicated region
    $region22: #{tpu_custom_call.1} parent=1 // pred_check
      _
    $region23: #{tpu_custom_call.1} parent=1 // pred_check_branch
      %55 = sbr.rel (0) target = $region25
    $region24: #{tpu_custom_call.1} parent=1 // pred_region
      %57 = dma.done [#allocation3], 128
    $region25: #{tpu_custom_call.1} parent=1 // pred_fallthru
      _
    // Predicated region
    $region26: #{tpu_custom_call.1} parent=1 // pred_check
      _
    $region27: #{tpu_custom_call.1} parent=1 // pred_check_branch
      %59 = sbr.rel (0) target = $region29
    $region28: #{tpu_custom_call.1} parent=1 // pred_region
      %61 = dma.done [#allocation6], 512
    $region29: #{tpu_custom_call.1} parent=1 // pred_fallthru
      _
    // Predicated region
    $region30: #{tpu_custom_call.1} parent=1 // pred_check
      _
    $region31: #{tpu_custom_call.1} parent=1 // pred_check_branch
      %63 = sbr.rel (0) target = $region33
    $region32: #{tpu_custom_call.1} parent=1 // pred_region
      %65 = dma.done [#allocation6], 2048
    $region33: #{tpu_custom_call.1} parent=1 // pred_fallthru
      _
    %v66 = vld [vmem:[#allocation2] sm:$0xff]
    %v67 = vld [vmem:[#allocation5] sm:$0xff]
    %v68 = vld [vmem:[#allocation5 + $0x8] sm:$0xff]
    %v69 = vld [vmem:[#allocation5 + $0x10] sm:$0xff]
    %v70 = vld [vmem:[#allocation5 + $0x18] sm:$0xff]
    %v71 = vld [vmem:[%s2] sm:$0x1]
    %v73 = vperm.slane %v71, 0
    %vm75 = vcmask 261120
    %v77 = vsel %vm75, %v66, 0
    %79 = vmatpush.msra.mxu0 0.0
    %80 = vmatpush.msra.mxu0 0.0
    %81 = vmatpush.msra.mxu0 0.0
    %82 = vmatpush.msra.mxu0 0.0
    %83 = vmatpush.msra.mxu0 0.0
    %84 = vmatpush.msra.mxu0 0.0
    %85 = vmatpush.msra.mxu0 0.0
    %86 = vmatpush.msra.mxu0 0.0
    %87 = vmatpush.msra.mxu0 0.0
    %88 = vmatpush.msra.mxu0 0.0
    %89 = vmatpush.msra.mxu0 0.0
    %90 = vmatpush.msra.mxu0 0.0
    %91 = vmatpush.msra.mxu0 %v70
    %92 = vmatpush.msra.mxu0 %v69
    %93 = vmatpush.msra.mxu0 %v68
    %94 = vmatpush.msra.mxu0 %v67
    %95 = vmatmul.f32.gmra.mxu0 %v77
    %v96 = vpop.f32.mrf.mxu0
    %v97 = vadd.f32 %v73, %v96
    %98 = vdwg.mxu0
    %v99 = vmax.f32 %v97, 0.0
    %v100 = vld [vmem:[#allocation7] sm:$0xff]
    %v101 = vld [vmem:[#allocation7 + $0x8] sm:$0xff]
    %v102 = vld [vmem:[#allocation7 + $0x10] sm:$0xff]
    %v103 = vld [vmem:[#allocation7 + $0x18] sm:$0xff]
    %v104 = vld [vmem:[#allocation7 + $0x20] sm:$0xff]
    %v105 = vld [vmem:[#allocation7 + $0x28] sm:$0xff]
    %v106 = vld [vmem:[#allocation7 + $0x30] sm:$0xff]
    %v107 = vld [vmem:[#allocation7 + $0x38] sm:$0xff]
    %v108 = vld [vmem:[#allocation7 + $0x40] sm:$0xff]
    %v109 = vld [vmem:[#allocation7 + $0x48] sm:$0xff]
    %v110 = vld [vmem:[#allocation7 + $0x50] sm:$0xff]
    %v111 = vld [vmem:[#allocation7 + $0x58] sm:$0xff]
    %v112 = vld [vmem:[#allocation7 + $0x60] sm:$0xff]
    %v113 = vld [vmem:[#allocation7 + $0x68] sm:$0xff]
    %v114 = vld [vmem:[#allocation7 + $0x70] sm:$0xff]
    %v115 = vld [vmem:[#allocation7 + $0x78] sm:$0xff]
    %v116 = vld [vmem:[%s4] sm:$0x1]
    %v118 = vperm.slane %v116, 0
    %120 = vmatpush.msra.mxu0 %v115
    %121 = vmatpush.msra.mxu0 %v114
    %122 = vmatpush.msra.mxu0 %v113
    %123 = vmatpush.msra.mxu0 %v112
    %124 = vmatpush.msra.mxu0 %v111
    %125 = vmatpush.msra.mxu0 %v110
    %126 = vmatpush.msra.mxu0 %v109
    %127 = vmatpush.msra.mxu0 %v108
    %128 = vmatpush.msra.mxu0 %v107
    %129 = vmatpush.msra.mxu0 %v106
    %130 = vmatpush.msra.mxu0 %v105
    %131 = vmatpush.msra.mxu0 %v104
    %132 = vmatpush.msra.mxu0 %v103
    %133 = vmatpush.msra.mxu0 %v102
    %134 = vmatpush.msra.mxu0 %v101
    %135 = vmatpush.msra.mxu0 %v100
    %136 = vmatmul.f32.gmra.mxu0 %v99
    %v137 = vpop.f32.mrf.mxu0
    %v138 = vadd.f32 %v118, %v137
    %139 = vdwg.mxu0
    %140 = vst [vmem:[#allocation8] sm:$0xff] %v138
    // Predicated region
    $region34: #{tpu_custom_call.1} parent=1 // pred_check
      _
    $region35: #{tpu_custom_call.1} parent=1 // pred_check_branch
      %142 = sbr.rel (0) target = $region37
    $region36: #{tpu_custom_call.1} parent=1 // pred_region
      %144 = vsyncadd [#allocation4], 0
      %s146 = sshll.u32 [#allocation8], 4
      %s147 = int_to_ptr.vmem [resolvable:$true] %s146
      %s148 = sshll.u32 %s5, 4
      %s149 = int_to_ptr.hbm [resolvable:$true] %s148
      %151 = dma.vmem_to_hbm [thread:$0]  %s147, 128, %s149, [#allocation4]
    $region37: #{tpu_custom_call.1} parent=1 // pred_fallthru
      _
    // Predicated region
    $region38: #{tpu_custom_call.1} parent=1 // pred_check
      _
    $region39: #{tpu_custom_call.1} parent=1 // pred_check_branch
      %153 = sbr.rel (0) target = $region41
    $region40: #{tpu_custom_call.1} parent=1 // pred_region
      %155 = dma.done [#allocation4], 128
    $region41: #{tpu_custom_call.1} parent=1 // pred_fallthru
      _
    %156 = vsyncpa [#allocation3], 1
    %157 = vsyncpa [#allocation6], 1
    %158 = vsyncpa [#allocation4], 1

</llo_original>
